<compile_context>
chip_gen: v5e
topology: v5e:2x2
jax: 0.10.0
libtpu: 0.0.40
codegen_flags: <defaults>
</compile_context>

<pallas_src>
import functools

import jax
import jax.numpy as jnp
import numpy as np
from jax.experimental import pallas as pl
from jax.experimental.pallas import tpu as pltpu

BN_EPS = 1e-5


def _mod(a, m):
    """a % m for non-negative int arrays; bitwise AND when m is a power of 2
    (decided at trace time, so the fast path costs nothing when it applies)."""
    if m & (m - 1) == 0:
        return jnp.bitwise_and(a, m - 1)
    return a % m


def resbottle_kernel(x_ref, w1_ref, w2c_ref, o_ref, patch_ref, *, H, W):
    # x_ref:     (CP, NHW)      input, channels zero-padded to an 8-sublane tile
    # w1_ref:    (C1, 9*CP)     conv1 weights, im2col-flattened, K padded
    # w2c_ref:   (C2, 10*CP)    [conv2 (9*CP) | 1x1-shortcut (CP)] stacked
    # o_ref:     (C2, NHW)      output, pixels on lanes (unmasked vst)
    # patch_ref: (10*CP, NHW)   f32 VMEM scratch: im2col patch + shortcut rows
    CP, NHW = x_ref.shape
    HW = H * W

    x = x_ref[...].astype(jnp.float32)                      # (CP, NHW)

    # ---- tap validity masks, computed in-kernel (zero HBM mask traffic).
    # Built once at (CP, NHW) — already sublane-broadcast — and shared by the
    # two im2col passes.  Only remainders are needed (AND for pow-2 sizes).
    p = jax.lax.broadcasted_iota(jnp.int32, (CP, NHW), 1)   # flat pixel index
    hw = _mod(p, HW)                                        # index within image
    ww = _mod(p, W)                                         # column index
    h_ok = {-1: jnp.where(hw >= W, 1.0, 0.0),               # row above exists
            0: None,
            1: jnp.where(hw < (H - 1) * W, 1.0, 0.0)}       # row below exists
    w_ok = {-1: jnp.where(ww >= 1, 1.0, 0.0),                # col left exists
            0: None,
            1: jnp.where(ww < (W - 1), 1.0, 0.0)}            # col right exists

    tap_mask = []
    for dy in range(3):
        for dx in range(3):
            mh, mw = h_ok[dy - 1], w_ok[dx - 1]
            if mh is None and mw is None:
                tap_mask.append(None)           # center tap: always valid
            elif mh is None:
                tap_mask.append(mw)
            elif mw is None:
                tap_mask.append(mh)
            else:
                tap_mask.append(mh * mw)

    def fill_patch(a):
        # Write the 9 masked / lane-rolled taps of `a` (shape (CP, NHW)) into
        # patch_ref rows [0, 9*CP); each tap is exactly one 8-sublane tile, so
        # only one tap is ever live in vregs.
        for dy in range(3):
            for dx in range(3):
                sy, sx = dy - 1, dx - 1
                tap = dy * 3 + dx
                row = tap * CP
                if sy == 0 and sx == 0:
                    patch_ref[pl.ds(row, CP), :] = a
                else:
                    d = sy * W + sx              # flat pixel offset of this tap
                    rolled = pltpu.roll(a, shift=(-d) % NHW, axis=1)
                    patch_ref[pl.ds(row, CP), :] = rolled * tap_mask[tap]

    # Shortcut input occupies the tail CP rows; written once, consumed by the
    # conv2 matmul (weights already hold the 1x1 shortcut in those K columns).
    patch_ref[pl.ds(9 * CP, CP), :] = x

    # ---- conv1: one im2col matmul, then ReLU ----
    fill_patch(x)
    h = jnp.dot(w1_ref[...], patch_ref[pl.ds(0, 9 * CP), :],
                preferred_element_type=jnp.float32)          # (C1, NHW)
    h = jnp.maximum(h, 0.0)

    # ---- BatchNorm2d (training-mode batch stats), one-pass sum / sumsq ----
    inv_n = jnp.float32(1.0 / NHW)
    mean = jnp.sum(h, axis=1, keepdims=True) * inv_n
    var = jnp.sum(h * h, axis=1, keepdims=True) * inv_n - mean * mean
    var = jnp.maximum(var, 0.0)                 # guard against cancellation
    h = (h - mean) * jax.lax.rsqrt(var + BN_EPS)

    # ---- conv2 (3x3) + folded 1x1 shortcut in a single matmul ----
    fill_patch(h)        # C1 == CP: h reuses the same tap rows and masks
    out = jnp.dot(w2c_ref[...], patch_ref[...],
                  preferred_element_type=jnp.float32)        # (C2, NHW)

    o_ref[...] = jnp.maximum(out, 0.0).astype(o_ref.dtype)


def resbottle_forward(x_nchw, w1_oihw, w2_oihw, ws_oihw):
    """Wrapper: NCHW / OIHW (PyTorch) in, NCHW out.

    All weight flattening / channel padding / stacking and the layout change
    to the lane-dense (C, N*H*W) kernel format happen here (trace-time only).
    """
    N, Cin, H, W = x_nchw.shape
    C1 = w1_oihw.shape[0]
    C2 = w2_oihw.shape[0]
    NHW = N * H * W

    # Pad the contracted channel axis to a full 8-sublane tile so every
    # im2col tap (and the appended shortcut rows) is tile-aligned.
    CP = 8 * ((max(Cin, C1) + 7) // 8)
    if C1 != CP:
        raise NotImplementedError(
            "fused kernel assumes conv1 out-channels == padded in-channels "
            "(true for ResBottle(4, 8, encoder=True))")

    # activations: (Cin, N*H*W) -> zero-pad channels to CP
    x_t = jnp.transpose(x_nchw, (1, 0, 2, 3)).reshape(Cin, NHW)
    x_t = jnp.pad(x_t, ((0, CP - Cin), (0, 0)))

    # conv1 weights: OIHW -> (C1, dy, dx, Cin) -> pad Cin per tap -> (C1, 9*CP)
    w1_t = jnp.transpose(w1_oihw, (0, 2, 3, 1))
    w1_t = jnp.pad(w1_t, ((0, 0), (0, 0), (0, 0), (0, CP - Cin))).reshape(C1, 9 * CP)

    # conv2 weights: OIHW -> (C2, dy, dx, C1) -> pad C1 per tap -> (C2, 9*CP)
    w2_t = jnp.transpose(w2_oihw, (0, 2, 3, 1))
    w2_t = jnp.pad(w2_t, ((0, 0), (0, 0), (0, 0), (0, CP - C1))).reshape(C2, 9 * CP)
    # 1x1 shortcut stacked along K (padded to CP): total K = 10*CP
    ws_t = jnp.pad(ws_oihw.reshape(C2, Cin), ((0, 0), (0, CP - Cin)))
    w2c = jnp.concatenate([w2_t, ws_t], axis=1)

    # TODO(synk): for large N*H*W, tile the pixel axis with a grid (the lane
    # rolls need a +-W halo per tile), mark it "parallel" so both v7x
    # TensorCores are used, split BatchNorm into a stats pass + normalize pass
    # so batch statistics stay global, size the tile for ~32 MiB scoped VMEM
    # on v7x (raise vmem_limit_bytes on v5e), and consider bf16 matmul inputs.
    out_t = pl.pallas_call(
        functools.partial(resbottle_kernel, H=H, W=W),
        out_shape=jax.ShapeDtypeStruct((C2, NHW), x_nchw.dtype),
        in_specs=[pl.BlockSpec(memory_space=pltpu.MemorySpace.VMEM)] * 3,
        out_specs=pl.BlockSpec(memory_space=pltpu.MemorySpace.VMEM),
        scratch_shapes=[pltpu.VMEM((10 * CP, NHW), jnp.float32)],
    )(x_t, w1_t, w2c)

    return jnp.transpose(out_t.reshape(C2, N, H, W), (1, 0, 2, 3))


def resbottle_reference(x, w1, w2, ws):
    """Pure-JAX reference (NCHW / OIHW), mirrors the PyTorch forward."""
    dn = ("NCHW", "OIHW", "NCHW")

    def conv(a, w, pad):
        return jax.lax.conv_general_dilated(
            a, w, window_strides=(1, 1), padding=[(pad, pad), (pad, pad)],
            dimension_numbers=dn)

    shortcut = conv(x, ws, 0)
    h = jnp.maximum(conv(x, w1, 1), 0.0)
    mean = jnp.mean(h, axis=(0, 2, 3), keepdims=True)
    var = jnp.mean(jnp.square(h - mean), axis=(0, 2, 3), keepdims=True)
    h = (h - mean) / jnp.sqrt(var + BN_EPS)
    h = conv(h, w2, 1)
    return jnp.maximum(h + shortcut, 0.0)


if __name__ == "__main__":
    # ResBottle(in_channels=4, out_channels=8, encoder=True):
    #   conv1: Conv2d(4 -> 8, 3x3), conv2: Conv2d(8 -> 8, 3x3),
    #   convshortcut: Conv2d(4 -> 8, 1x1)
    in_ch, out_ch = 4, 8
    N, H, W = 2, 16, 16

    key = jax.random.PRNGKey(0)
    kx, k1, k2, ks = jax.random.split(key, 4)
    x = jax.random.normal(kx, (N, in_ch, H, W), jnp.float32)
    w1 = jax.random.normal(k1, (out_ch, in_ch, 3, 3), jnp.float32) * 0.2
    w2 = jax.random.normal(k2, (out_ch, out_ch, 3, 3), jnp.float32) * 0.2
    ws = jax.random.normal(ks, (out_ch, in_ch, 1, 1), jnp.float32) * 0.2

    y = jax.block_until_ready(resbottle_forward(x, w1, w2, ws))
    y_ref = jax.block_until_ready(resbottle_reference(x, w1, w2, ws))

    assert y.shape == (N, out_ch, H, W), y.shape
    np.testing.assert_allclose(np.asarray(y), np.asarray(y_ref),
                               rtol=1e-4, atol=1e-4)
    print("KERNEL_OK")
</pallas_src>

<mosaic_0001>
module attributes {stable_mosaic.version = 11 : i64} {
  func.func @resbottle_kernel(%arg0: memref<8x512xf32, #tpu.memory_space<vmem>>, %arg1: memref<8x72xf32, #tpu.memory_space<vmem>>, %arg2: memref<8x80xf32, #tpu.memory_space<vmem>>, %arg3: memref<8x512xf32, #tpu.memory_space<vmem>>, %arg4: memref<80x512xf32, #tpu.memory_space<vmem>>) attributes {dimension_semantics = [], scalar_prefetch = 0 : i64, scratch_operands = 1 : i64, tpu.core_type = #tpu.core_type<tc>} {
    %c0 = arith.constant 0 : index
    %c0_0 = arith.constant 0 : index
    %0 = vector.load %arg0[%c0, %c0_0] : memref<8x512xf32, #tpu.memory_space<vmem>>, vector<8x512xf32>
    %1 = tpu.iota {dimensions = array<i32: 1>} : vector<8x512xi32>
    %c255_i32 = arith.constant 255 : i32
    %2 = vector.broadcast %c255_i32 : i32 to vector<8x512xi32>
    %3 = arith.andi %1, %2 : vector<8x512xi32>
    %c15_i32 = arith.constant 15 : i32
    %4 = vector.broadcast %c15_i32 : i32 to vector<8x512xi32>
    %5 = arith.andi %1, %4 : vector<8x512xi32>
    %c16_i32 = arith.constant 16 : i32
    %6 = vector.broadcast %c16_i32 : i32 to vector<8x512xi32>
    %7 = arith.cmpi sge, %3, %6 : vector<8x512xi32>
    %cst = arith.constant 1.000000e+00 : f32
    %cst_1 = arith.constant 0.000000e+00 : f32
    %8 = vector.broadcast %cst : f32 to vector<8x512xf32>
    %9 = vector.broadcast %cst_1 : f32 to vector<8x512xf32>
    %10 = arith.select %7, %8, %9 : vector<8x512xi1>, vector<8x512xf32>
    %c240_i32 = arith.constant 240 : i32
    %11 = vector.broadcast %c240_i32 : i32 to vector<8x512xi32>
    %12 = arith.cmpi slt, %3, %11 : vector<8x512xi32>
    %cst_2 = arith.constant 1.000000e+00 : f32
    %cst_3 = arith.constant 0.000000e+00 : f32
    %13 = vector.broadcast %cst_2 : f32 to vector<8x512xf32>
    %14 = vector.broadcast %cst_3 : f32 to vector<8x512xf32>
    %15 = arith.select %12, %13, %14 : vector<8x512xi1>, vector<8x512xf32>
    %c1_i32 = arith.constant 1 : i32
    %16 = vector.broadcast %c1_i32 : i32 to vector<8x512xi32>
    %17 = arith.cmpi sge, %5, %16 : vector<8x512xi32>
    %cst_4 = arith.constant 1.000000e+00 : f32
    %cst_5 = arith.constant 0.000000e+00 : f32
    %18 = vector.broadcast %cst_4 : f32 to vector<8x512xf32>
    %19 = vector.broadcast %cst_5 : f32 to vector<8x512xf32>
    %20 = arith.select %17, %18, %19 : vector<8x512xi1>, vector<8x512xf32>
    %c15_i32_6 = arith.constant 15 : i32
    %21 = vector.broadcast %c15_i32_6 : i32 to vector<8x512xi32>
    %22 = arith.cmpi slt, %5, %21 : vector<8x512xi32>
    %cst_7 = arith.constant 1.000000e+00 : f32
    %cst_8 = arith.constant 0.000000e+00 : f32
    %23 = vector.broadcast %cst_7 : f32 to vector<8x512xf32>
    %24 = vector.broadcast %cst_8 : f32 to vector<8x512xf32>
    %25 = arith.select %22, %23, %24 : vector<8x512xi1>, vector<8x512xf32>
    %26 = arith.mulf %10, %20 : vector<8x512xf32>
    %27 = arith.mulf %10, %25 : vector<8x512xf32>
    %28 = arith.mulf %15, %20 : vector<8x512xf32>
    %29 = arith.mulf %15, %25 : vector<8x512xf32>
    %c72 = arith.constant 72 : index
    %c0_9 = arith.constant 0 : index
    %30 = vector.load %arg4[%c72, %c0_9] : memref<80x512xf32, #tpu.memory_space<vmem>>, vector<8x512xf32>
    tpu.vector_store %arg4[%c72, %c0_9], %0 {strides = array<i32>} : memref<80x512xf32, #tpu.memory_space<vmem>>, vector<8x512xf32>,
    %c17_i32 = arith.constant 17 : i32
    %31 = tpu.dynamic_rotate %0 by %c17_i32 dim 1 : vector<8x512xf32>, i32 -> vector<8x512xf32>
    %32 = arith.mulf %31, %26 : vector<8x512xf32>
    %c0_10 = arith.constant 0 : index
    %c0_11 = arith.constant 0 : index
    %33 = vector.load %arg4[%c0_10, %c0_11] : memref<80x512xf32, #tpu.memory_space<vmem>>, vector<8x512xf32>
    tpu.vector_store %arg4[%c0_10, %c0_11], %32 {strides = array<i32>} : memref<80x512xf32, #tpu.memory_space<vmem>>, vector<8x512xf32>,
    %c16_i32_12 = arith.constant 16 : i32
    %34 = tpu.dynamic_rotate %0 by %c16_i32_12 dim 1 : vector<8x512xf32>, i32 -> vector<8x512xf32>
    %35 = arith.mulf %34, %10 : vector<8x512xf32>
    %c8 = arith.constant 8 : index
    %c0_13 = arith.constant 0 : index
    %36 = vector.load %arg4[%c8, %c0_13] : memref<80x512xf32, #tpu.memory_space<vmem>>, vector<8x512xf32>
    tpu.vector_store %arg4[%c8, %c0_13], %35 {strides = array<i32>} : memref<80x512xf32, #tpu.memory_space<vmem>>, vector<8x512xf32>,
    %c15_i32_14 = arith.constant 15 : i32
    %37 = tpu.dynamic_rotate %0 by %c15_i32_14 dim 1 : vector<8x512xf32>, i32 -> vector<8x512xf32>
    %38 = arith.mulf %37, %27 : vector<8x512xf32>
    %c16 = arith.constant 16 : index
    %c0_15 = arith.constant 0 : index
    %39 = vector.load %arg4[%c16, %c0_15] : memref<80x512xf32, #tpu.memory_space<vmem>>, vector<8x512xf32>
    tpu.vector_store %arg4[%c16, %c0_15], %38 {strides = array<i32>} : memref<80x512xf32, #tpu.memory_space<vmem>>, vector<8x512xf32>,
    %c1_i32_16 = arith.constant 1 : i32
    %40 = tpu.dynamic_rotate %0 by %c1_i32_16 dim 1 : vector<8x512xf32>, i32 -> vector<8x512xf32>
    %41 = arith.mulf %40, %20 : vector<8x512xf32>
    %c24 = arith.constant 24 : index
    %c0_17 = arith.constant 0 : index
    %42 = vector.load %arg4[%c24, %c0_17] : memref<80x512xf32, #tpu.memory_space<vmem>>, vector<8x512xf32>
    tpu.vector_store %arg4[%c24, %c0_17], %41 {strides = array<i32>} : memref<80x512xf32, #tpu.memory_space<vmem>>, vector<8x512xf32>,
    %c32 = arith.constant 32 : index
    %c0_18 = arith.constant 0 : index
    %43 = vector.load %arg4[%c32, %c0_18] : memref<80x512xf32, #tpu.memory_space<vmem>>, vector<8x512xf32>
    tpu.vector_store %arg4[%c32, %c0_18], %0 {strides = array<i32>} : memref<80x512xf32, #tpu.memory_space<vmem>>, vector<8x512xf32>,
    %c511_i32 = arith.constant 511 : i32
    %44 = tpu.dynamic_rotate %0 by %c511_i32 dim 1 : vector<8x512xf32>, i32 -> vector<8x512xf32>
    %45 = arith.mulf %44, %25 : vector<8x512xf32>
    %c40 = arith.constant 40 : index
    %c0_19 = arith.constant 0 : index
    %46 = vector.load %arg4[%c40, %c0_19] : memref<80x512xf32, #tpu.memory_space<vmem>>, vector<8x512xf32>
    tpu.vector_store %arg4[%c40, %c0_19], %45 {strides = array<i32>} : memref<80x512xf32, #tpu.memory_space<vmem>>, vector<8x512xf32>,
    %c497_i32 = arith.constant 497 : i32
    %47 = tpu.dynamic_rotate %0 by %c497_i32 dim 1 : vector<8x512xf32>, i32 -> vector<8x512xf32>
    %48 = arith.mulf %47, %28 : vector<8x512xf32>
    %c48 = arith.constant 48 : index
    %c0_20 = arith.constant 0 : index
    %49 = vector.load %arg4[%c48, %c0_20] : memref<80x512xf32, #tpu.memory_space<vmem>>, vector<8x512xf32>
    tpu.vector_store %arg4[%c48, %c0_20], %48 {strides = array<i32>} : memref<80x512xf32, #tpu.memory_space<vmem>>, vector<8x512xf32>,
    %c496_i32 = arith.constant 496 : i32
    %50 = tpu.dynamic_rotate %0 by %c496_i32 dim 1 : vector<8x512xf32>, i32 -> vector<8x512xf32>
    %51 = arith.mulf %50, %15 : vector<8x512xf32>
    %c56 = arith.constant 56 : index
    %c0_21 = arith.constant 0 : index
    %52 = vector.load %arg4[%c56, %c0_21] : memref<80x512xf32, #tpu.memory_space<vmem>>, vector<8x512xf32>
    tpu.vector_store %arg4[%c56, %c0_21], %51 {strides = array<i32>} : memref<80x512xf32, #tpu.memory_space<vmem>>, vector<8x512xf32>,
    %c495_i32 = arith.constant 495 : i32
    %53 = tpu.dynamic_rotate %0 by %c495_i32 dim 1 : vector<8x512xf32>, i32 -> vector<8x512xf32>
    %54 = arith.mulf %53, %29 : vector<8x512xf32>
    %c64 = arith.constant 64 : index
    %c0_22 = arith.constant 0 : index
    %55 = vector.load %arg4[%c64, %c0_22] : memref<80x512xf32, #tpu.memory_space<vmem>>, vector<8x512xf32>
    tpu.vector_store %arg4[%c64, %c0_22], %54 {strides = array<i32>} : memref<80x512xf32, #tpu.memory_space<vmem>>, vector<8x512xf32>,
    %c0_23 = arith.constant 0 : index
    %c0_24 = arith.constant 0 : index
    %56 = vector.load %arg1[%c0_23, %c0_24] : memref<8x72xf32, #tpu.memory_space<vmem>>, vector<8x72xf32>
    %c0_25 = arith.constant 0 : index
    %c0_26 = arith.constant 0 : index
    %57 = vector.load %arg4[%c0_25, %c0_26] : memref<80x512xf32, #tpu.memory_space<vmem>>, vector<72x512xf32>
    %cst_27 = arith.constant dense<0.000000e+00> : vector<8x512xf32>
    %58 = tpu.matmul %56, %57, %cst_27 {dimension_numbers = #tpu.dot_dimension_numbers<[1], [0], [0], [1], [0, 0, 1, 1], [], []>} : vector<8x72xf32>, vector<72x512xf32>, vector<8x512xf32> -> vector<8x512xf32>
    %cst_28 = arith.constant 0.000000e+00 : f32
    %59 = vector.broadcast %cst_28 : f32 to vector<8x512xf32>
    %60 = arith.maximumf %58, %59 : vector<8x512xf32>
    %cst_29 = arith.constant dense<0.000000e+00> : vector<8xf32>
    %61 = vector.multi_reduction <add>, %60, %cst_29 [1] : vector<8x512xf32> to vector<8xf32>
    %62 = vector.shape_cast %61 : vector<8xf32> to vector<8x1xf32>
    %cst_30 = arith.constant 0.001953125 : f32
    %63 = vector.broadcast %cst_30 : f32 to vector<8x1xf32>
    %64 = arith.mulf %62, %63 : vector<8x1xf32>
    %65 = arith.mulf %60, %60 : vector<8x512xf32>
    %cst_31 = arith.constant dense<0.000000e+00> : vector<8xf32>
    %66 = vector.multi_reduction <add>, %65, %cst_31 [1] : vector<8x512xf32> to vector<8xf32>
    %67 = vector.shape_cast %66 : vector<8xf32> to vector<8x1xf32>
    %cst_32 = arith.constant 0.001953125 : f32
    %68 = vector.broadcast %cst_32 : f32 to vector<8x1xf32>
    %69 = arith.mulf %67, %68 : vector<8x1xf32>
    %70 = arith.mulf %64, %64 : vector<8x1xf32>
    %71 = arith.subf %69, %70 : vector<8x1xf32>
    %cst_33 = arith.constant 0.000000e+00 : f32
    %72 = vector.broadcast %cst_33 : f32 to vector<8x1xf32>
    %73 = arith.maximumf %71, %72 : vector<8x1xf32>
    %74 = vector.broadcast %64 : vector<8x1xf32> to vector<8x512xf32>
    %75 = arith.subf %60, %74 : vector<8x512xf32>
    %cst_34 = arith.constant 9.99999974E-6 : f32
    %76 = vector.broadcast %cst_34 : f32 to vector<8x1xf32>
    %77 = arith.addf %73, %76 : vector<8x1xf32>
    %78 = math.rsqrt %77 : vector<8x1xf32>
    %79 = vector.broadcast %78 : vector<8x1xf32> to vector<8x512xf32>
    %80 = arith.mulf %75, %79 : vector<8x512xf32>
    %c17_i32_35 = arith.constant 17 : i32
    %81 = tpu.dynamic_rotate %80 by %c17_i32_35 dim 1 : vector<8x512xf32>, i32 -> vector<8x512xf32>
    %82 = arith.mulf %81, %26 : vector<8x512xf32>
    %c0_36 = arith.constant 0 : index
    %c0_37 = arith.constant 0 : index
    %83 = vector.load %arg4[%c0_36, %c0_37] : memref<80x512xf32, #tpu.memory_space<vmem>>, vector<8x512xf32>
    tpu.vector_store %arg4[%c0_36, %c0_37], %82 {strides = array<i32>} : memref<80x512xf32, #tpu.memory_space<vmem>>, vector<8x512xf32>,
    %c16_i32_38 = arith.constant 16 : i32
    %84 = tpu.dynamic_rotate %80 by %c16_i32_38 dim 1 : vector<8x512xf32>, i32 -> vector<8x512xf32>
    %85 = arith.mulf %84, %10 : vector<8x512xf32>
    %c8_39 = arith.constant 8 : index
    %c0_40 = arith.constant 0 : index
    %86 = vector.load %arg4[%c8_39, %c0_40] : memref<80x512xf32, #tpu.memory_space<vmem>>, vector<8x512xf32>
    tpu.vector_store %arg4[%c8_39, %c0_40], %85 {strides = array<i32>} : memref<80x512xf32, #tpu.memory_space<vmem>>, vector<8x512xf32>,
    %c15_i32_41 = arith.constant 15 : i32
    %87 = tpu.dynamic_rotate %80 by %c15_i32_41 dim 1 : vector<8x512xf32>, i32 -> vector<8x512xf32>
    %88 = arith.mulf %87, %27 : vector<8x512xf32>
    %c16_42 = arith.constant 16 : index
    %c0_43 = arith.constant 0 : index
    %89 = vector.load %arg4[%c16_42, %c0_43] : memref<80x512xf32, #tpu.memory_space<vmem>>, vector<8x512xf32>
    tpu.vector_store %arg4[%c16_42, %c0_43], %88 {strides = array<i32>} : memref<80x512xf32, #tpu.memory_space<vmem>>, vector<8x512xf32>,
    %c1_i32_44 = arith.constant 1 : i32
    %90 = tpu.dynamic_rotate %80 by %c1_i32_44 dim 1 : vector<8x512xf32>, i32 -> vector<8x512xf32>
    %91 = arith.mulf %90, %20 : vector<8x512xf32>
    %c24_45 = arith.constant 24 : index
    %c0_46 = arith.constant 0 : index
    %92 = vector.load %arg4[%c24_45, %c0_46] : memref<80x512xf32, #tpu.memory_space<vmem>>, vector<8x512xf32>
    tpu.vector_store %arg4[%c24_45, %c0_46], %91 {strides = array<i32>} : memref<80x512xf32, #tpu.memory_space<vmem>>, vector<8x512xf32>,
    %c32_47 = arith.constant 32 : index
    %c0_48 = arith.constant 0 : index
    %93 = vector.load %arg4[%c32_47, %c0_48] : memref<80x512xf32, #tpu.memory_space<vmem>>, vector<8x512xf32>
    tpu.vector_store %arg4[%c32_47, %c0_48], %80 {strides = array<i32>} : memref<80x512xf32, #tpu.memory_space<vmem>>, vector<8x512xf32>,
    %c511_i32_49 = arith.constant 511 : i32
    %94 = tpu.dynamic_rotate %80 by %c511_i32_49 dim 1 : vector<8x512xf32>, i32 -> vector<8x512xf32>
    %95 = arith.mulf %94, %25 : vector<8x512xf32>
    %c40_50 = arith.constant 40 : index
    %c0_51 = arith.constant 0 : index
    %96 = vector.load %arg4[%c40_50, %c0_51] : memref<80x512xf32, #tpu.memory_space<vmem>>, vector<8x512xf32>
    tpu.vector_store %arg4[%c40_50, %c0_51], %95 {strides = array<i32>} : memref<80x512xf32, #tpu.memory_space<vmem>>, vector<8x512xf32>,
    %c497_i32_52 = arith.constant 497 : i32
    %97 = tpu.dynamic_rotate %80 by %c497_i32_52 dim 1 : vector<8x512xf32>, i32 -> vector<8x512xf32>
    %98 = arith.mulf %97, %28 : vector<8x512xf32>
    %c48_53 = arith.constant 48 : index
    %c0_54 = arith.constant 0 : index
    %99 = vector.load %arg4[%c48_53, %c0_54] : memref<80x512xf32, #tpu.memory_space<vmem>>, vector<8x512xf32>
    tpu.vector_store %arg4[%c48_53, %c0_54], %98 {strides = array<i32>} : memref<80x512xf32, #tpu.memory_space<vmem>>, vector<8x512xf32>,
    %c496_i32_55 = arith.constant 496 : i32
    %100 = tpu.dynamic_rotate %80 by %c496_i32_55 dim 1 : vector<8x512xf32>, i32 -> vector<8x512xf32>
    %101 = arith.mulf %100, %15 : vector<8x512xf32>
    %c56_56 = arith.constant 56 : index
    %c0_57 = arith.constant 0 : index
    %102 = vector.load %arg4[%c56_56, %c0_57] : memref<80x512xf32, #tpu.memory_space<vmem>>, vector<8x512xf32>
    tpu.vector_store %arg4[%c56_56, %c0_57], %101 {strides = array<i32>} : memref<80x512xf32, #tpu.memory_space<vmem>>, vector<8x512xf32>,
    %c495_i32_58 = arith.constant 495 : i32
    %103 = tpu.dynamic_rotate %80 by %c495_i32_58 dim 1 : vector<8x512xf32>, i32 -> vector<8x512xf32>
    %104 = arith.mulf %103, %29 : vector<8x512xf32>
    %c64_59 = arith.constant 64 : index
    %c0_60 = arith.constant 0 : index
    %105 = vector.load %arg4[%c64_59, %c0_60] : memref<80x512xf32, #tpu.memory_space<vmem>>, vector<8x512xf32>
    tpu.vector_store %arg4[%c64_59, %c0_60], %104 {strides = array<i32>} : memref<80x512xf32, #tpu.memory_space<vmem>>, vector<8x512xf32>,
    %c0_61 = arith.constant 0 : index
    %c0_62 = arith.constant 0 : index
    %106 = vector.load %arg2[%c0_61, %c0_62] : memref<8x80xf32, #tpu.memory_space<vmem>>, vector<8x80xf32>
    %c0_63 = arith.constant 0 : index
    %c0_64 = arith.constant 0 : index
    %107 = vector.load %arg4[%c0_63, %c0_64] : memref<80x512xf32, #tpu.memory_space<vmem>>, vector<80x512xf32>
    %cst_65 = arith.constant dense<0.000000e+00> : vector<8x512xf32>
    %108 = tpu.matmul %106, %107, %cst_65 {dimension_numbers = #tpu.dot_dimension_numbers<[1], [0], [0], [1], [0, 0, 1, 1], [], []>} : vector<8x80xf32>, vector<80x512xf32>, vector<8x512xf32> -> vector<8x512xf32>
    %cst_66 = arith.constant 0.000000e+00 : f32
    %109 = vector.broadcast %cst_66 : f32 to vector<8x512xf32>
    %110 = arith.maximumf %108, %109 : vector<8x512xf32>
    %c0_67 = arith.constant 0 : index
    %c0_68 = arith.constant 0 : index
    %111 = vector.load %arg3[%c0_67, %c0_68] : memref<8x512xf32, #tpu.memory_space<vmem>>, vector<8x512xf32>
    tpu.vector_store %arg3[%c0_67, %c0_68], %110 {strides = array<i32>} : memref<8x512xf32, #tpu.memory_space<vmem>>, vector<8x512xf32>,
    return
  }
}

</mosaic_0001>

<llo_original>
// kernel: tpu_custom_call.1
$region0: #{tpu_custom_call.1}
  #allocation0 [shape = 'u32[]', space=smem, size = 0x4, offset = 0x4, fixed_abs, tag = 'smem constant byte address 0x4 - core index']
  #allocation1 [shape = 'u32[72,128]{1,0:T(1,128)}', space=vmem, size = 0x9000, scoped, tag = 'internal scratch']
  #allocation2 [shape = 'f32[80,512]{1,0:T(8,128)}', space=vmem, size = 0x28000, scoped, tag = 'scratch operand']
  %s0 = inlined_call_operand.hbm [shape: f32[8,512], index: 0, kind: input, shape index: {}]
  %s1 = inlined_call_operand.hbm [shape: f32[8,72], index: 1, kind: input, shape index: {}]
  %s2 = inlined_call_operand.hbm [shape: f32[8,80], index: 2, kind: input, shape index: {}]
  %s3 = inlined_call_operand.hbm [shape: f32[8,512], index: 3, kind: output, shape index: {}]
  %s4 = sld [smem:[#allocation0]]
  $region34: #{tpu_custom_call.1} parent=0
    _
  %s6 = ssub.s32 1, %s4
  %s7 = scalar_select 0, %s6, %s4
  $region1: #{tpu_custom_call.1} parent=0
    #allocation3 [shape = 'u8[16384]{0}', space=vmem, size = 0x4000, scoped, tag = 'input window, operand 0, single buffered']
    #allocation4 [shape = 's32[1]{0}', space=sflag, size = 0x4, scoped, tag = 'scoped memory for tpu_custom_call.1']
    #allocation5 [shape = 's32[1]{0}', space=sflag, size = 0x4, scoped, tag = 'scoped memory for tpu_custom_call.1']
    #allocation6 [shape = 'u8[4096]{0}', space=vmem, size = 0x1000, scoped, tag = 'input window, operand 1, single buffered']
    #allocation7 [shape = 's32[1]{0}', space=sflag, size = 0x4, scoped, tag = 'scoped memory for tpu_custom_call.1']
    #allocation8 [shape = 'u8[4096]{0}', space=vmem, size = 0x1000, scoped, tag = 'input window, operand 2, single buffered']
    #allocation9 [shape = 'u8[16384]{0}', space=vmem, size = 0x4000, scoped, tag = 'output window, operand 0, single buffered']
    %8 = vsyncpa [#allocation4], 0
    %9 = vsyncpa [#allocation7], 0
    %10 = vsyncpa [#allocation5], 0
    // Predicated region
    $region2: #{tpu_custom_call.1} parent=1 // pred_check
      _
    $region3: #{tpu_custom_call.1} parent=1 // pred_check_branch
      %12 = sbr.rel (0) target = $region5
    $region4: #{tpu_custom_call.1} parent=1 // pred_region
      %14 = vsyncadd [#allocation4], 0
      %s16 = sshll.u32 %s0, 4
      %s17 = int_to_ptr.hbm [resolvable:$true] %s16
      %s18 = sshll.u32 [#allocation3], 4
      %s19 = int_to_ptr.vmem [resolvable:$true] %s18
      %21 = dma.hbm_to_vmem [thread:$0]  %s17, 512, %s19, [#allocation4]
    $region5: #{tpu_custom_call.1} parent=1 // pred_fallthru
      _
    // Predicated region
    $region6: #{tpu_custom_call.1} parent=1 // pred_check
      _
    $region7: #{tpu_custom_call.1} parent=1 // pred_check_branch
      %23 = sbr.rel (0) target = $region9
    $region8: #{tpu_custom_call.1} parent=1 // pred_region
      %25 = vsyncadd [#allocation7], 0
      %s27 = sshll.u32 %s1, 4
      %s28 = int_to_ptr.hbm [resolvable:$true] %s27
      %s29 = sshll.u32 [#allocation6], 4
      %s30 = int_to_ptr.vmem [resolvable:$true] %s29
      %32 = dma.hbm_to_vmem [thread:$0]  %s28, 128, %s30, [#allocation7]
    $region9: #{tpu_custom_call.1} parent=1 // pred_fallthru
      _
    // Predicated region
    $region10: #{tpu_custom_call.1} parent=1 // pred_check
      _
    $region11: #{tpu_custom_call.1} parent=1 // pred_check_branch
      %34 = sbr.rel (0) target = $region13
    $region12: #{tpu_custom_call.1} parent=1 // pred_region
      %36 = vsyncadd [#allocation7], 0
      %s38 = sshll.u32 %s2, 4
      %s39 = int_to_ptr.hbm [resolvable:$true] %s38
      %s40 = sshll.u32 [#allocation8], 4
      %s41 = int_to_ptr.vmem [resolvable:$true] %s40
      %43 = dma.hbm_to_vmem [thread:$0]  %s39, 128, %s41, [#allocation7]
    $region13: #{tpu_custom_call.1} parent=1 // pred_fallthru
      _
    // Predicated region
    $region14: #{tpu_custom_call.1} parent=1 // pred_check
      _
    $region15: #{tpu_custom_call.1} parent=1 // pred_check_branch
      %45 = sbr.rel (0) target = $region17
    $region16: #{tpu_custom_call.1} parent=1 // pred_region
      %47 = dma.done [#allocation4], 512
    $region17: #{tpu_custom_call.1} parent=1 // pred_fallthru
      _
    // Predicated region
    $region18: #{tpu_custom_call.1} parent=1 // pred_check
      _
    $region19: #{tpu_custom_call.1} parent=1 // pred_check_branch
      %49 = sbr.rel (0) target = $region21
    $region20: #{tpu_custom_call.1} parent=1 // pred_region
      %51 = dma.done [#allocation7], 128
    $region21: #{tpu_custom_call.1} parent=1 // pred_fallthru
      _
    // Predicated region
    $region22: #{tpu_custom_call.1} parent=1 // pred_check
      _
    $region23: #{tpu_custom_call.1} parent=1 // pred_check_branch
      %53 = sbr.rel (0) target = $region25
    $region24: #{tpu_custom_call.1} parent=1 // pred_region
      %55 = dma.done [#allocation7], 128
    $region25: #{tpu_custom_call.1} parent=1 // pred_fallthru
      _
    %v56 = vld [vmem:[#allocation3] sm:$0xff]
    %v57 = vld [vmem:[#allocation3 + $0x8] sm:$0xff]
    %v58 = vld [vmem:[#allocation3 + $0x10] sm:$0xff]
    %v59 = vld [vmem:[#allocation3 + $0x18] sm:$0xff]
    %v60 = vlaneseq
    %v61 = vand.u32 %v60, 127
    %v62 = vadd.s32 %v61, 128
    %v63 = vadd.s32 %v61, 256
    %v64 = vadd.s32 %v61, 384
    %v65 = vand.u32 %v61, 255
    %v66 = vand.u32 %v62, 255
    %v67 = vand.u32 %v63, 255
    %v68 = vand.u32 %v64, 255
    %v69 = vand.u32 %v61, 15
    %v70 = vand.u32 %v62, 15
    %v71 = vand.u32 %v63, 15
    %v72 = vand.u32 %v64, 15
    %vm73 = vcmp.ge.s32.totalorder %v65, 16
    %vm74 = vcmp.ge.s32.totalorder %v66, 16
    %vm75 = vcmp.ge.s32.totalorder %v67, 16
    %vm76 = vcmp.ge.s32.totalorder %v68, 16
    %v77 = vsel %vm73, 1.0, 0.0
    %v78 = vsel %vm74, 1.0, 0.0
    %v79 = vsel %vm75, 1.0, 0.0
    %v80 = vsel %vm76, 1.0, 0.0
    %vm81 = vcmp.lt.s32.totalorder %v65, 240
    %vm82 = vcmp.lt.s32.totalorder %v66, 240
    %vm83 = vcmp.lt.s32.totalorder %v67, 240
    %vm84 = vcmp.lt.s32.totalorder %v68, 240
    %v85 = vsel %vm81, 1.0, 0.0
    %v86 = vsel %vm82, 1.0, 0.0
    %v87 = vsel %vm83, 1.0, 0.0
    %v88 = vsel %vm84, 1.0, 0.0
    %vm89 = vcmp.ge.s32.totalorder %v69, 1
    %vm90 = vcmp.ge.s32.totalorder %v70, 1
    %vm91 = vcmp.ge.s32.totalorder %v71, 1
    %vm92 = vcmp.ge.s32.totalorder %v72, 1
    %v93 = vsel %vm89, 1.0, 0.0
    %v94 = vsel %vm90, 1.0, 0.0
    %v95 = vsel %vm91, 1.0, 0.0
    %v96 = vsel %vm92, 1.0, 0.0
    %vm97 = vcmp.lt.s32.totalorder %v69, 15
    %vm98 = vcmp.lt.s32.totalorder %v70, 15
    %vm99 = vcmp.lt.s32.totalorder %v71, 15
    %vm100 = vcmp.lt.s32.totalorder %v72, 15
    %v101 = vsel %vm97, 1.0, 0.0
    %v102 = vsel %vm98, 1.0, 0.0
    %v103 = vsel %vm99, 1.0, 0.0
    %v104 = vsel %vm100, 1.0, 0.0
    %v105 = vmul.f32 %v77, %v93
    %v106 = vmul.f32 %v78, %v94
    %v107 = vmul.f32 %v79, %v95
    %v108 = vmul.f32 %v80, %v96
    %v109 = vmul.f32 %v77, %v101
    %v110 = vmul.f32 %v78, %v102
    %v111 = vmul.f32 %v79, %v103
    %v112 = vmul.f32 %v80, %v104
    %v113 = vmul.f32 %v85, %v93
    %v114 = vmul.f32 %v86, %v94
    %v115 = vmul.f32 %v87, %v95
    %v116 = vmul.f32 %v88, %v96
    %v117 = vmul.f32 %v85, %v101
    %v118 = vmul.f32 %v86, %v102
    %v119 = vmul.f32 %v87, %v103
    %v120 = vmul.f32 %v88, %v104
    %121 = vst [vmem:[#allocation2 + $0x120] sm:$0xff] %v56
    %122 = vst [vmem:[#allocation2 + $0x128] sm:$0xff] %v57
    %123 = vst [vmem:[#allocation2 + $0x130] sm:$0xff] %v58
    %124 = vst [vmem:[#allocation2 + $0x138] sm:$0xff] %v59
    %125 = vrot.lane.b32.xlu0 %v56, 17
    %v126 = vpop.permute.xlu0 %125
    %127 = vrot.lane.b32.xlu0 %v57, 17
    %v128 = vpop.permute.xlu0 %127
    %129 = vrot.lane.b32.xlu0 %v58, 17
    %v130 = vpop.permute.xlu0 %129
    %131 = vrot.lane.b32.xlu0 %v59, 17
    %v132 = vpop.permute.xlu0 %131
    %vm133 = vcmp.lt.s32.totalorder %v61, 17
    %v134 = vsel %vm133, %v130, %v132
    %v135 = vsel %vm133, %v128, %v130
    %v136 = vsel %vm133, %v126, %v128
    %v137 = vsel %vm133, %v132, %v126
    %v138 = vmul.f32 %v137, %v105
    %v139 = vmul.f32 %v136, %v106
    %v140 = vmul.f32 %v135, %v107
    %v141 = vmul.f32 %v134, %v108
    %142 = vst [vmem:[#allocation2] sm:$0xff] %v138
    %143 = vst [vmem:[#allocation2 + $0x8] sm:$0xff] %v139
    %144 = vst [vmem:[#allocation2 + $0x10] sm:$0xff] %v140
    %145 = vst [vmem:[#allocation2 + $0x18] sm:$0xff] %v141
    %146 = vrot.lane.b32.xlu0 %v56, 16
    %v147 = vpop.permute.xlu0 %146
    %148 = vrot.lane.b32.xlu0 %v57, 16
    %v149 = vpop.permute.xlu0 %148
    %150 = vrot.lane.b32.xlu0 %v58, 16
    %v151 = vpop.permute.xlu0 %150
    %152 = vrot.lane.b32.xlu0 %v59, 16
    %v153 = vpop.permute.xlu0 %152
    %vm154 = vcmp.lt.s32.totalorder %v61, 16
    %v155 = vsel %vm154, %v151, %v153
    %v156 = vsel %vm154, %v149, %v151
    %v157 = vsel %vm154, %v147, %v149
    %v158 = vsel %vm154, %v153, %v147
    %v159 = vmul.f32 %v158, %v77
    %v160 = vmul.f32 %v157, %v78
    %v161 = vmul.f32 %v156, %v79
    %v162 = vmul.f32 %v155, %v80
    %163 = vst [vmem:[#allocation2 + $0x20] sm:$0xff] %v159
    %164 = vst [vmem:[#allocation2 + $0x28] sm:$0xff] %v160
    %165 = vst [vmem:[#allocation2 + $0x30] sm:$0xff] %v161
    %166 = vst [vmem:[#allocation2 + $0x38] sm:$0xff] %v162
    %167 = vrot.lane.b32.xlu0 %v56, 15
    %v168 = vpop.permute.xlu0 %167
    %169 = vrot.lane.b32.xlu0 %v57, 15
    %v170 = vpop.permute.xlu0 %169
    %171 = vrot.lane.b32.xlu0 %v58, 15
    %v172 = vpop.permute.xlu0 %171
    %173 = vrot.lane.b32.xlu0 %v59, 15
    %v174 = vpop.permute.xlu0 %173
    %vm175 = vcmp.lt.s32.totalorder %v61, 15
    %v176 = vsel %vm175, %v172, %v174
    %v177 = vsel %vm175, %v170, %v172
    %v178 = vsel %vm175, %v168, %v170
    %v179 = vsel %vm175, %v174, %v168
    %v180 = vmul.f32 %v179, %v109
    %v181 = vmul.f32 %v178, %v110
    %v182 = vmul.f32 %v177, %v111
    %v183 = vmul.f32 %v176, %v112
    %184 = vst [vmem:[#allocation2 + $0x40] sm:$0xff] %v180
    %185 = vst [vmem:[#allocation2 + $0x48] sm:$0xff] %v181
    %186 = vst [vmem:[#allocation2 + $0x50] sm:$0xff] %v182
    %187 = vst [vmem:[#allocation2 + $0x58] sm:$0xff] %v183
    %188 = vrot.lane.b32.xlu0 %v56, 1
    %v189 = vpop.permute.xlu0 %188
    %190 = vrot.lane.b32.xlu0 %v57, 1
    %v191 = vpop.permute.xlu0 %190
    %192 = vrot.lane.b32.xlu0 %v58, 1
    %v193 = vpop.permute.xlu0 %192
    %194 = vrot.lane.b32.xlu0 %v59, 1
    %v195 = vpop.permute.xlu0 %194
    %vm196 = vcmp.lt.s32.totalorder %v61, 1
    %v197 = vsel %vm196, %v193, %v195
    %v198 = vsel %vm196, %v191, %v193
    %v199 = vsel %vm196, %v189, %v191
    %v200 = vsel %vm196, %v195, %v189
    %v201 = vmul.f32 %v200, %v93
    %v202 = vmul.f32 %v199, %v94
    %v203 = vmul.f32 %v198, %v95
    %v204 = vmul.f32 %v197, %v96
    %205 = vst [vmem:[#allocation2 + $0x60] sm:$0xff] %v201
    %206 = vst [vmem:[#allocation2 + $0x68] sm:$0xff] %v202
    %207 = vst [vmem:[#allocation2 + $0x70] sm:$0xff] %v203
    %208 = vst [vmem:[#allocation2 + $0x78] sm:$0xff] %v204
    %209 = vst [vmem:[#allocation2 + $0x80] sm:$0xff] %v56
    %210 = vst [vmem:[#allocation2 + $0x88] sm:$0xff] %v57
    %211 = vst [vmem:[#allocation2 + $0x90] sm:$0xff] %v58
    %212 = vst [vmem:[#allocation2 + $0x98] sm:$0xff] %v59
    %213 = vrot.lane.b32.xlu0 %v56, 127
    %v214 = vpop.permute.xlu0 %213
    %215 = vrot.lane.b32.xlu0 %v57, 127
    %v216 = vpop.permute.xlu0 %215
    %217 = vrot.lane.b32.xlu0 %v58, 127
    %v218 = vpop.permute.xlu0 %217
    %219 = vrot.lane.b32.xlu0 %v59, 127
    %v220 = vpop.permute.xlu0 %219
    %vm221 = vcmp.lt.s32.totalorder %v61, 127
    %v222 = vsel %vm221, %v218, %v220
    %v223 = vsel %vm221, %v216, %v218
    %v224 = vsel %vm221, %v214, %v216
    %v225 = vsel %vm221, %v220, %v214
    %v226 = vmul.f32 %v224, %v101
    %v227 = vmul.f32 %v223, %v102
    %v228 = vmul.f32 %v222, %v103
    %v229 = vmul.f32 %v225, %v104
    %230 = vst [vmem:[#allocation2 + $0xa0] sm:$0xff] %v226
    %231 = vst [vmem:[#allocation2 + $0xa8] sm:$0xff] %v227
    %232 = vst [vmem:[#allocation2 + $0xb0] sm:$0xff] %v228
    %233 = vst [vmem:[#allocation2 + $0xb8] sm:$0xff] %v229
    %234 = vrot.lane.b32.xlu0 %v56, 113
    %v235 = vpop.permute.xlu0 %234
    %236 = vrot.lane.b32.xlu0 %v57, 113
    %v237 = vpop.permute.xlu0 %236
    %238 = vrot.lane.b32.xlu0 %v58, 113
    %v239 = vpop.permute.xlu0 %238
    %240 = vrot.lane.b32.xlu0 %v59, 113
    %v241 = vpop.permute.xlu0 %240
    %vm242 = vcmp.lt.s32.totalorder %v61, 113
    %v243 = vsel %vm242, %v239, %v241
    %v244 = vsel %vm242, %v237, %v239
    %v245 = vsel %vm242, %v235, %v237
    %v246 = vsel %vm242, %v241, %v235
    %v247 = vmul.f32 %v245, %v113
    %v248 = vmul.f32 %v244, %v114
    %v249 = vmul.f32 %v243, %v115
    %v250 = vmul.f32 %v246, %v116
    %251 = vst [vmem:[#allocation2 + $0xc0] sm:$0xff] %v247
    %252 = vst [vmem:[#allocation2 + $0xc8] sm:$0xff] %v248
    %253 = vst [vmem:[#allocation2 + $0xd0] sm:$0xff] %v249
    %254 = vst [vmem:[#allocation2 + $0xd8] sm:$0xff] %v250
    %255 = vrot.lane.b32.xlu0 %v56, 112
    %v256 = vpop.permute.xlu0 %255
    %257 = vrot.lane.b32.xlu0 %v57, 112
    %v258 = vpop.permute.xlu0 %257
    %259 = vrot.lane.b32.xlu0 %v58, 112
    %v260 = vpop.permute.xlu0 %259
    %261 = vrot.lane.b32.xlu0 %v59, 112
    %v262 = vpop.permute.xlu0 %261
    %vm263 = vcmp.lt.s32.totalorder %v61, 112
    %v264 = vsel %vm263, %v260, %v262
    %v265 = vsel %vm263, %v258, %v260
    %v266 = vsel %vm263, %v256, %v258
    %v267 = vsel %vm263, %v262, %v256
    %v268 = vmul.f32 %v266, %v85
    %v269 = vmul.f32 %v265, %v86
    %v270 = vmul.f32 %v264, %v87
    %v271 = vmul.f32 %v267, %v88
    %272 = vst [vmem:[#allocation2 + $0xe0] sm:$0xff] %v268
    %273 = vst [vmem:[#allocation2 + $0xe8] sm:$0xff] %v269
    %274 = vst [vmem:[#allocation2 + $0xf0] sm:$0xff] %v270
    %275 = vst [vmem:[#allocation2 + $0xf8] sm:$0xff] %v271
    %276 = vrot.lane.b32.xlu0 %v56, 111
    %v277 = vpop.permute.xlu0 %276
    %278 = vrot.lane.b32.xlu0 %v57, 111
    %v279 = vpop.permute.xlu0 %278
    %280 = vrot.lane.b32.xlu0 %v58, 111
    %v281 = vpop.permute.xlu0 %280
    %282 = vrot.lane.b32.xlu0 %v59, 111
    %v283 = vpop.permute.xlu0 %282
    %vm284 = vcmp.lt.s32.totalorder %v61, 111
    %v285 = vsel %vm284, %v281, %v283
    %v286 = vsel %vm284, %v279, %v281
    %v287 = vsel %vm284, %v277, %v279
    %v288 = vsel %vm284, %v283, %v277
    %v289 = vmul.f32 %v287, %v117
    %v290 = vmul.f32 %v286, %v118
    %v291 = vmul.f32 %v285, %v119
    %v292 = vmul.f32 %v288, %v120
    %293 = vst [vmem:[#allocation2 + $0x100] sm:$0xff] %v289
    %294 = vst [vmem:[#allocation2 + $0x108] sm:$0xff] %v290
    %295 = vst [vmem:[#allocation2 + $0x110] sm:$0xff] %v291
    %296 = vst [vmem:[#allocation2 + $0x118] sm:$0xff] %v292
    %v297 = vld [vmem:[#allocation6] sm:$0xff]
    %v298 = vld [vmem:[#allocation2] sm:$0xff]
    %v299 = vld [vmem:[#allocation2 + $0x8] sm:$0xff]
    %v300 = vld [vmem:[#allocation2 + $0x10] sm:$0xff]
    %v301 = vld [vmem:[#allocation2 + $0x18] sm:$0xff]
    %v302 = vld [vmem:[#allocation2 + $0x20] sm:$0xff]
    %v303 = vld [vmem:[#allocation2 + $0x28] sm:$0xff]
    %v304 = vld [vmem:[#allocation2 + $0x30] sm:$0xff]
    %v305 = vld [vmem:[#allocation2 + $0x38] sm:$0xff]
    %v306 = vld [vmem:[#allocation2 + $0x40] sm:$0xff]
    %v307 = vld [vmem:[#allocation2 + $0x48] sm:$0xff]
    %v308 = vld [vmem:[#allocation2 + $0x50] sm:$0xff]
    %v309 = vld [vmem:[#allocation2 + $0x58] sm:$0xff]
    %v310 = vld [vmem:[#allocation2 + $0x60] sm:$0xff]
    %v311 = vld [vmem:[#allocation2 + $0x68] sm:$0xff]
    %v312 = vld [vmem:[#allocation2 + $0x70] sm:$0xff]
    %v313 = vld [vmem:[#allocation2 + $0x78] sm:$0xff]
    %v314 = vld [vmem:[#allocation2 + $0x80] sm:$0xff]
    %v315 = vld [vmem:[#allocation2 + $0x88] sm:$0xff]
    %v316 = vld [vmem:[#allocation2 + $0x90] sm:$0xff]
    %v317 = vld [vmem:[#allocation2 + $0x98] sm:$0xff]
    %v318 = vld [vmem:[#allocation2 + $0xa0] sm:$0xff]
    %v319 = vld [vmem:[#allocation2 + $0xa8] sm:$0xff]
    %v320 = vld [vmem:[#allocation2 + $0xb0] sm:$0xff]
    %v321 = vld [vmem:[#allocation2 + $0xb8] sm:$0xff]
    %v322 = vld [vmem:[#allocation2 + $0xc0] sm:$0xff]
    %v323 = vld [vmem:[#allocation2 + $0xc8] sm:$0xff]
    %v324 = vld [vmem:[#allocation2 + $0xd0] sm:$0xff]
    %v325 = vld [vmem:[#allocation2 + $0xd8] sm:$0xff]
    %v326 = vld [vmem:[#allocation2 + $0xe0] sm:$0xff]
    %v327 = vld [vmem:[#allocation2 + $0xe8] sm:$0xff]
    %v328 = vld [vmem:[#allocation2 + $0xf0] sm:$0xff]
    %v329 = vld [vmem:[#allocation2 + $0xf8] sm:$0xff]
    %v330 = vld [vmem:[#allocation2 + $0x100] sm:$0xff]
    %v331 = vld [vmem:[#allocation2 + $0x108] sm:$0xff]
    %v332 = vld [vmem:[#allocation2 + $0x110] sm:$0xff]
    %v333 = vld [vmem:[#allocation2 + $0x118] sm:$0xff]
    %vm334 = vcmask 588800
    %v336 = vsel %vm334, %v297, 0
    %338 = vmatpush.msra.mxu0 0.0
    %339 = vmatpush.msra.mxu0 0.0
    %340 = vmatpush.msra.mxu0 0.0
    %341 = vmatpush.msra.mxu0 0.0
    %342 = vmatpush.msra.mxu0 0.0
    %343 = vmatpush.msra.mxu0 0.0
    %344 = vmatpush.msra.mxu0 0.0
    %345 = vmatpush.msra.mxu0 %v330
    %346 = vmatpush.msra.mxu0 %v326
    %347 = vmatpush.msra.mxu0 %v322
    %348 = vmatpush.msra.mxu0 %v318
    %349 = vmatpush.msra.mxu0 %v314
    %350 = vmatpush.msra.mxu0 %v310
    %351 = vmatpush.msra.mxu0 %v306
    %352 = vmatpush.msra.mxu0 %v302
    %353 = vmatpush.msra.mxu0 %v298
    %354 = vmatmul.f32.gmra.mxu0 %v336
    %v355 = vpop.f32.mrf.mxu0
    %v356 = vadd.f32 0.0, %v355
    %357 = vdwg.mxu0
    %358 = vmatpush.msra.mxu0 0.0
    %359 = vmatpush.msra.mxu0 0.0
    %360 = vmatpush.msra.mxu0 0.0
    %361 = vmatpush.msra.mxu0 0.0
    %362 = vmatpush.msra.mxu0 0.0
    %363 = vmatpush.msra.mxu0 0.0
    %364 = vmatpush.msra.mxu0 0.0
    %365 = vmatpush.msra.mxu0 %v331
    %366 = vmatpush.msra.mxu0 %v327
    %367 = vmatpush.msra.mxu0 %v323
    %368 = vmatpush.msra.mxu0 %v319
    %369 = vmatpush.msra.mxu0 %v315
    %370 = vmatpush.msra.mxu0 %v311
    %371 = vmatpush.msra.mxu0 %v307
    %372 = vmatpush.msra.mxu0 %v303
    %373 = vmatpush.msra.mxu0 %v299
    %374 = vmatmul.f32.gmra.mxu0 %v336
    %v375 = vpop.f32.mrf.mxu0
    %v376 = vadd.f32 0.0, %v375
    %377 = vdwg.mxu0
    %378 = vmatpush.msra.mxu0 0.0
    %379 = vmatpush.msra.mxu0 0.0
    %380 = vmatpush.msra.mxu0 0.0
    %381 = vmatpush.msra.mxu0 0.0
    %382 = vmatpush.msra.mxu0 0.0
    %383 = vmatpush.msra.mxu0 0.0
    %384 = vmatpush.msra.mxu0 0.0
    %385 = vmatpush.msra.mxu0 %v332
    %386 = vmatpush.msra.mxu0 %v328
    %387 = vmatpush.msra.mxu0 %v324
    %388 = vmatpush.msra.mxu0 %v320
    %389 = vmatpush.msra.mxu0 %v316
    %390 = vmatpush.msra.mxu0 %v312
    %391 = vmatpush.msra.mxu0 %v308
    %392 = vmatpush.msra.mxu0 %v304
    %393 = vmatpush.msra.mxu0 %v300
    %394 = vmatmul.f32.gmra.mxu0 %v336
    %v395 = vpop.f32.mrf.mxu0
    %v396 = vadd.f32 0.0, %v395
    %397 = vdwg.mxu0
    %398 = vmatpush.msra.mxu0 0.0
    %399 = vmatpush.msra.mxu0 0.0
    %400 = vmatpush.msra.mxu0 0.0
    %401 = vmatpush.msra.mxu0 0.0
    %402 = vmatpush.msra.mxu0 0.0
    %403 = vmatpush.msra.mxu0 0.0
    %404 = vmatpush.msra.mxu0 0.0
    %405 = vmatpush.msra.mxu0 %v333
    %406 = vmatpush.msra.mxu0 %v329
    %407 = vmatpush.msra.mxu0 %v325
    %408 = vmatpush.msra.mxu0 %v321
    %409 = vmatpush.msra.mxu0 %v317
    %410 = vmatpush.msra.mxu0 %v313
    %411 = vmatpush.msra.mxu0 %v309
    %412 = vmatpush.msra.mxu0 %v305
    %413 = vmatpush.msra.mxu0 %v301
    %414 = vmatmul.f32.gmra.mxu0 %v336
    %v415 = vpop.f32.mrf.mxu0
    %v416 = vadd.f32 0.0, %v415
    %417 = vdwg.mxu0
    %v418 = vmax.f32 %v356, 0.0
    %v419 = vmax.f32 %v376, 0.0
    %v420 = vmax.f32 %v396, 0.0
    %v421 = vmax.f32 %v416, 0.0
    %v422 = vadd.f32 %v418, %v419
    %v423 = vadd.f32 %v422, %v420
    %v424 = vadd.f32 %v423, %v421
    %425 = vadd.xlane.f32.xlu0 %v424
    %v426 = vpop.xlane.xlu0 %425
    %v427 = vmul.f32 %v426, 0.001953125
    %v428 = vmul.f32 %v418, %v418
    %v429 = vmul.f32 %v419, %v419
    %v430 = vmul.f32 %v420, %v420
    %v431 = vmul.f32 %v421, %v421
    %v432 = vadd.f32 %v428, %v429
    %v433 = vadd.f32 %v432, %v430
    %v434 = vadd.f32 %v433, %v431
    %435 = vadd.xlane.f32.xlu0 %v434
    %v436 = vpop.xlane.xlu0 %435
    %v437 = vmul.f32 %v436, 0.001953125
    %v438 = vmul.f32 %v427, %v427
    %v439 = vsub.f32 %v437, %v438
    %v440 = vmax.f32 %v439, 0.0
    %v441 = vsub.f32 %v418, %v427
    %v442 = vsub.f32 %v419, %v427
    %v443 = vsub.f32 %v420, %v427
    %v444 = vsub.f32 %v421, %v427
    %v445 = vadd.f32 %v440, 1e-05
    %v446 = vrsqrt.pop %v445
    %v447 = vmul.f32 %v446, %v445
    %v448 = vmul.f32 %v447, %v446
    %v449 = vmul.f32 0.5, %v448
    %v450 = vsub.f32 1.5, %v449
    %v451 = vmul.f32 %v446, %v450
    %vm452 = vweird.f32 %v445
    %vm453 = vweird.f32 %v446
    %vm454 = vmor %vm452, %vm453
    %v455 = vsel %vm454, %v446, %v451
    %v456 = vmul.f32 %v441, %v455
    %v457 = vmul.f32 %v442, %v455
    %v458 = vmul.f32 %v443, %v455
    %v459 = vmul.f32 %v444, %v455
    %460 = vrot.lane.b32.xlu0 %v456, 17
    %v461 = vpop.permute.xlu0 %460
    %462 = vrot.lane.b32.xlu0 %v457, 17
    %v463 = vpop.permute.xlu0 %462
    %464 = vrot.lane.b32.xlu0 %v458, 17
    %v465 = vpop.permute.xlu0 %464
    %466 = vrot.lane.b32.xlu0 %v459, 17
    %v467 = vpop.permute.xlu0 %466
    %v468 = vsel %vm133, %v465, %v467
    %v469 = vsel %vm133, %v463, %v465
    %v470 = vsel %vm133, %v461, %v463
    %v471 = vsel %vm133, %v467, %v461
    %v472 = vmul.f32 %v471, %v105
    %v473 = vmul.f32 %v470, %v106
    %v474 = vmul.f32 %v469, %v107
    %v475 = vmul.f32 %v468, %v108
    %476 = vst [vmem:[#allocation2] sm:$0xff] %v472
    %477 = vst [vmem:[#allocation2 + $0x8] sm:$0xff] %v473
    %478 = vst [vmem:[#allocation2 + $0x10] sm:$0xff] %v474
    %479 = vst [vmem:[#allocation2 + $0x18] sm:$0xff] %v475
    %480 = vrot.lane.b32.xlu0 %v456, 16
    %v481 = vpop.permute.xlu0 %480
    %482 = vrot.lane.b32.xlu0 %v457, 16
    %v483 = vpop.permute.xlu0 %482
    %484 = vrot.lane.b32.xlu0 %v458, 16
    %v485 = vpop.permute.xlu0 %484
    %486 = vrot.lane.b32.xlu0 %v459, 16
    %v487 = vpop.permute.xlu0 %486
    %v488 = vsel %vm154, %v485, %v487
    %v489 = vsel %vm154, %v483, %v485
    %v490 = vsel %vm154, %v481, %v483
    %v491 = vsel %vm154, %v487, %v481
    %v492 = vmul.f32 %v491, %v77
    %v493 = vmul.f32 %v490, %v78
    %v494 = vmul.f32 %v489, %v79
    %v495 = vmul.f32 %v488, %v80
    %496 = vst [vmem:[#allocation2 + $0x20] sm:$0xff] %v492
    %497 = vst [vmem:[#allocation2 + $0x28] sm:$0xff] %v493
    %498 = vst [vmem:[#allocation2 + $0x30] sm:$0xff] %v494
    %499 = vst [vmem:[#allocation2 + $0x38] sm:$0xff] %v495
    %500 = vrot.lane.b32.xlu0 %v456, 15
    %v501 = vpop.permute.xlu0 %500
    %502 = vrot.lane.b32.xlu0 %v457, 15
    %v503 = vpop.permute.xlu0 %502
    %504 = vrot.lane.b32.xlu0 %v458, 15
    %v505 = vpop.permute.xlu0 %504
    %506 = vrot.lane.b32.xlu0 %v459, 15
    %v507 = vpop.permute.xlu0 %506
    %v508 = vsel %vm175, %v505, %v507
    %v509 = vsel %vm175, %v503, %v505
    %v510 = vsel %vm175, %v501, %v503
    %v511 = vsel %vm175, %v507, %v501
    %v512 = vmul.f32 %v511, %v109
    %v513 = vmul.f32 %v510, %v110
    %v514 = vmul.f32 %v509, %v111
    %v515 = vmul.f32 %v508, %v112
    %516 = vst [vmem:[#allocation2 + $0x40] sm:$0xff] %v512
    %517 = vst [vmem:[#allocation2 + $0x48] sm:$0xff] %v513
    %518 = vst [vmem:[#allocation2 + $0x50] sm:$0xff] %v514
    %519 = vst [vmem:[#allocation2 + $0x58] sm:$0xff] %v515
    %520 = vrot.lane.b32.xlu0 %v456, 1
    %v521 = vpop.permute.xlu0 %520
    %522 = vrot.lane.b32.xlu0 %v457, 1
    %v523 = vpop.permute.xlu0 %522
    %524 = vrot.lane.b32.xlu0 %v458, 1
    %v525 = vpop.permute.xlu0 %524
    %526 = vrot.lane.b32.xlu0 %v459, 1
    %v527 = vpop.permute.xlu0 %526
    %v528 = vsel %vm196, %v525, %v527
    %v529 = vsel %vm196, %v523, %v525
    %v530 = vsel %vm196, %v521, %v523
    %v531 = vsel %vm196, %v527, %v521
    %v532 = vmul.f32 %v531, %v93
    %v533 = vmul.f32 %v530, %v94
    %v534 = vmul.f32 %v529, %v95
    %v535 = vmul.f32 %v528, %v96
    %536 = vst [vmem:[#allocation2 + $0x60] sm:$0xff] %v532
    %537 = vst [vmem:[#allocation2 + $0x68] sm:$0xff] %v533
    %538 = vst [vmem:[#allocation2 + $0x70] sm:$0xff] %v534
    %539 = vst [vmem:[#allocation2 + $0x78] sm:$0xff] %v535
    %540 = vst [vmem:[#allocation2 + $0x80] sm:$0xff] %v456
    %541 = vst [vmem:[#allocation2 + $0x88] sm:$0xff] %v457
    %542 = vst [vmem:[#allocation2 + $0x90] sm:$0xff] %v458
    %543 = vst [vmem:[#allocation2 + $0x98] sm:$0xff] %v459
    %544 = vrot.lane.b32.xlu0 %v456, 127
    %v545 = vpop.permute.xlu0 %544
    %546 = vrot.lane.b32.xlu0 %v457, 127
    %v547 = vpop.permute.xlu0 %546
    %548 = vrot.lane.b32.xlu0 %v458, 127
    %v549 = vpop.permute.xlu0 %548
    %550 = vrot.lane.b32.xlu0 %v459, 127
    %v551 = vpop.permute.xlu0 %550
    %v552 = vsel %vm221, %v549, %v551
    %v553 = vsel %vm221, %v547, %v549
    %v554 = vsel %vm221, %v545, %v547
    %v555 = vsel %vm221, %v551, %v545
    %v556 = vmul.f32 %v554, %v101
    %v557 = vmul.f32 %v553, %v102
    %v558 = vmul.f32 %v552, %v103
    %v559 = vmul.f32 %v555, %v104
    %560 = vst [vmem:[#allocation2 + $0xa0] sm:$0xff] %v556
    %561 = vst [vmem:[#allocation2 + $0xa8] sm:$0xff] %v557
    %562 = vst [vmem:[#allocation2 + $0xb0] sm:$0xff] %v558
    %563 = vst [vmem:[#allocation2 + $0xb8] sm:$0xff] %v559
    %564 = vrot.lane.b32.xlu0 %v456, 113
    %v565 = vpop.permute.xlu0 %564
    %566 = vrot.lane.b32.xlu0 %v457, 113
    %v567 = vpop.permute.xlu0 %566
    %568 = vrot.lane.b32.xlu0 %v458, 113
    %v569 = vpop.permute.xlu0 %568
    %570 = vrot.lane.b32.xlu0 %v459, 113
    %v571 = vpop.permute.xlu0 %570
    %v572 = vsel %vm242, %v569, %v571
    %v573 = vsel %vm242, %v567, %v569
    %v574 = vsel %vm242, %v565, %v567
    %v575 = vsel %vm242, %v571, %v565
    %v576 = vmul.f32 %v574, %v113
    %v577 = vmul.f32 %v573, %v114
    %v578 = vmul.f32 %v572, %v115
    %v579 = vmul.f32 %v575, %v116
    %580 = vst [vmem:[#allocation2 + $0xc0] sm:$0xff] %v576
    %581 = vst [vmem:[#allocation2 + $0xc8] sm:$0xff] %v577
    %582 = vst [vmem:[#allocation2 + $0xd0] sm:$0xff] %v578
    %583 = vst [vmem:[#allocation2 + $0xd8] sm:$0xff] %v579
    %584 = vrot.lane.b32.xlu0 %v456, 112
    %v585 = vpop.permute.xlu0 %584
    %586 = vrot.lane.b32.xlu0 %v457, 112
    %v587 = vpop.permute.xlu0 %586
    %588 = vrot.lane.b32.xlu0 %v458, 112
    %v589 = vpop.permute.xlu0 %588
    %590 = vrot.lane.b32.xlu0 %v459, 112
    %v591 = vpop.permute.xlu0 %590
    %v592 = vsel %vm263, %v589, %v591
    %v593 = vsel %vm263, %v587, %v589
    %v594 = vsel %vm263, %v585, %v587
    %v595 = vsel %vm263, %v591, %v585
    %v596 = vmul.f32 %v594, %v85
    %v597 = vmul.f32 %v593, %v86
    %v598 = vmul.f32 %v592, %v87
    %v599 = vmul.f32 %v595, %v88
    %600 = vst [vmem:[#allocation2 + $0xe0] sm:$0xff] %v596
    %601 = vst [vmem:[#allocation2 + $0xe8] sm:$0xff] %v597
    %602 = vst [vmem:[#allocation2 + $0xf0] sm:$0xff] %v598
    %603 = vst [vmem:[#allocation2 + $0xf8] sm:$0xff] %v599
    %604 = vrot.lane.b32.xlu0 %v456, 111
    %v605 = vpop.permute.xlu0 %604
    %606 = vrot.lane.b32.xlu0 %v457, 111
    %v607 = vpop.permute.xlu0 %606
    %608 = vrot.lane.b32.xlu0 %v458, 111
    %v609 = vpop.permute.xlu0 %608
    %610 = vrot.lane.b32.xlu0 %v459, 111
    %v611 = vpop.permute.xlu0 %610
    %v612 = vsel %vm284, %v609, %v611
    %v613 = vsel %vm284, %v607, %v609
    %v614 = vsel %vm284, %v605, %v607
    %v615 = vsel %vm284, %v611, %v605
    %v616 = vmul.f32 %v614, %v117
    %v617 = vmul.f32 %v613, %v118
    %v618 = vmul.f32 %v612, %v119
    %v619 = vmul.f32 %v615, %v120
    %620 = vst [vmem:[#allocation2 + $0x100] sm:$0xff] %v616
    %621 = vst [vmem:[#allocation2 + $0x108] sm:$0xff] %v617
    %622 = vst [vmem:[#allocation2 + $0x110] sm:$0xff] %v618
    %623 = vst [vmem:[#allocation2 + $0x118] sm:$0xff] %v619
    %v624 = vld [vmem:[#allocation8] sm:$0xff]
    %v625 = vld [vmem:[#allocation2] sm:$0xff]
    %v626 = vld [vmem:[#allocation2 + $0x8] sm:$0xff]
    %v627 = vld [vmem:[#allocation2 + $0x10] sm:$0xff]
    %v628 = vld [vmem:[#allocation2 + $0x18] sm:$0xff]
    %v629 = vld [vmem:[#allocation2 + $0x20] sm:$0xff]
    %v630 = vld [vmem:[#allocation2 + $0x28] sm:$0xff]
    %v631 = vld [vmem:[#allocation2 + $0x30] sm:$0xff]
    %v632 = vld [vmem:[#allocation2 + $0x38] sm:$0xff]
    %v633 = vld [vmem:[#allocation2 + $0x40] sm:$0xff]
    %v634 = vld [vmem:[#allocation2 + $0x48] sm:$0xff]
    %v635 = vld [vmem:[#allocation2 + $0x50] sm:$0xff]
    %v636 = vld [vmem:[#allocation2 + $0x58] sm:$0xff]
    %v637 = vld [vmem:[#allocation2 + $0x60] sm:$0xff]
    %v638 = vld [vmem:[#allocation2 + $0x68] sm:$0xff]
    %v639 = vld [vmem:[#allocation2 + $0x70] sm:$0xff]
    %v640 = vld [vmem:[#allocation2 + $0x78] sm:$0xff]
    %v641 = vld [vmem:[#allocation2 + $0x80] sm:$0xff]
    %v642 = vld [vmem:[#allocation2 + $0x88] sm:$0xff]
    %v643 = vld [vmem:[#allocation2 + $0x90] sm:$0xff]
    %v644 = vld [vmem:[#allocation2 + $0x98] sm:$0xff]
    %v645 = vld [vmem:[#allocation2 + $0xa0] sm:$0xff]
    %v646 = vld [vmem:[#allocation2 + $0xa8] sm:$0xff]
    %v647 = vld [vmem:[#allocation2 + $0xb0] sm:$0xff]
    %v648 = vld [vmem:[#allocation2 + $0xb8] sm:$0xff]
    %v649 = vld [vmem:[#allocation2 + $0xc0] sm:$0xff]
    %v650 = vld [vmem:[#allocation2 + $0xc8] sm:$0xff]
    %v651 = vld [vmem:[#allocation2 + $0xd0] sm:$0xff]
    %v652 = vld [vmem:[#allocation2 + $0xd8] sm:$0xff]
    %v653 = vld [vmem:[#allocation2 + $0xe0] sm:$0xff]
    %v654 = vld [vmem:[#allocation2 + $0xe8] sm:$0xff]
    %v655 = vld [vmem:[#allocation2 + $0xf0] sm:$0xff]
    %v656 = vld [vmem:[#allocation2 + $0xf8] sm:$0xff]
    %v657 = vld [vmem:[#allocation2 + $0x100] sm:$0xff]
    %v658 = vld [vmem:[#allocation2 + $0x108] sm:$0xff]
    %v659 = vld [vmem:[#allocation2 + $0x110] sm:$0xff]
    %v660 = vld [vmem:[#allocation2 + $0x118] sm:$0xff]
    %v661 = vld [vmem:[#allocation2 + $0x120] sm:$0xff]
    %v662 = vld [vmem:[#allocation2 + $0x128] sm:$0xff]
    %v663 = vld [vmem:[#allocation2 + $0x130] sm:$0xff]
    %v664 = vld [vmem:[#allocation2 + $0x138] sm:$0xff]
    %vm665 = vcmask 654336
    %v667 = vsel %vm665, %v624, 0
    %669 = vmatpush.msra.mxu0 0.0
    %670 = vmatpush.msra.mxu0 0.0
    %671 = vmatpush.msra.mxu0 0.0
    %672 = vmatpush.msra.mxu0 0.0
    %673 = vmatpush.msra.mxu0 0.0
    %674 = vmatpush.msra.mxu0 0.0
    %675 = vmatpush.msra.mxu0 %v661
    %676 = vmatpush.msra.mxu0 %v657
    %677 = vmatpush.msra.mxu0 %v653
    %678 = vmatpush.msra.mxu0 %v649
    %679 = vmatpush.msra.mxu0 %v645
    %680 = vmatpush.msra.mxu0 %v641
    %681 = vmatpush.msra.mxu0 %v637
    %682 = vmatpush.msra.mxu0 %v633
    %683 = vmatpush.msra.mxu0 %v629
    %684 = vmatpush.msra.mxu0 %v625
    %685 = vmatmul.f32.gmra.mxu0 %v667
    %v686 = vpop.f32.mrf.mxu0
    %v687 = vadd.f32 0.0, %v686
    %688 = vdwg.mxu0
    %689 = vmatpush.msra.mxu0 0.0
    %690 = vmatpush.msra.mxu0 0.0
    %691 = vmatpush.msra.mxu0 0.0
    %692 = vmatpush.msra.mxu0 0.0
    %693 = vmatpush.msra.mxu0 0.0
    %694 = vmatpush.msra.mxu0 0.0
    %695 = vmatpush.msra.mxu0 %v662
    %696 = vmatpush.msra.mxu0 %v658
    %697 = vmatpush.msra.mxu0 %v654
    %698 = vmatpush.msra.mxu0 %v650
    %699 = vmatpush.msra.mxu0 %v646
    %700 = vmatpush.msra.mxu0 %v642
    %701 = vmatpush.msra.mxu0 %v638
    %702 = vmatpush.msra.mxu0 %v634
    %703 = vmatpush.msra.mxu0 %v630
    %704 = vmatpush.msra.mxu0 %v626
    %705 = vmatmul.f32.gmra.mxu0 %v667
    %v706 = vpop.f32.mrf.mxu0
    %v707 = vadd.f32 0.0, %v706
    %708 = vdwg.mxu0
    %709 = vmatpush.msra.mxu0 0.0
    %710 = vmatpush.msra.mxu0 0.0
    %711 = vmatpush.msra.mxu0 0.0
    %712 = vmatpush.msra.mxu0 0.0
    %713 = vmatpush.msra.mxu0 0.0
    %714 = vmatpush.msra.mxu0 0.0
    %715 = vmatpush.msra.mxu0 %v663
    %716 = vmatpush.msra.mxu0 %v659
    %717 = vmatpush.msra.mxu0 %v655
    %718 = vmatpush.msra.mxu0 %v651
    %719 = vmatpush.msra.mxu0 %v647
    %720 = vmatpush.msra.mxu0 %v643
    %721 = vmatpush.msra.mxu0 %v639
    %722 = vmatpush.msra.mxu0 %v635
    %723 = vmatpush.msra.mxu0 %v631
    %724 = vmatpush.msra.mxu0 %v627
    %725 = vmatmul.f32.gmra.mxu0 %v667
    %v726 = vpop.f32.mrf.mxu0
    %v727 = vadd.f32 0.0, %v726
    %728 = vdwg.mxu0
    %729 = vmatpush.msra.mxu0 0.0
    %730 = vmatpush.msra.mxu0 0.0
    %731 = vmatpush.msra.mxu0 0.0
    %732 = vmatpush.msra.mxu0 0.0
    %733 = vmatpush.msra.mxu0 0.0
    %734 = vmatpush.msra.mxu0 0.0
    %735 = vmatpush.msra.mxu0 %v664
    %736 = vmatpush.msra.mxu0 %v660
    %737 = vmatpush.msra.mxu0 %v656
    %738 = vmatpush.msra.mxu0 %v652
    %739 = vmatpush.msra.mxu0 %v648
    %740 = vmatpush.msra.mxu0 %v644
    %741 = vmatpush.msra.mxu0 %v640
    %742 = vmatpush.msra.mxu0 %v636
    %743 = vmatpush.msra.mxu0 %v632
    %744 = vmatpush.msra.mxu0 %v628
    %745 = vmatmul.f32.gmra.mxu0 %v667
    %v746 = vpop.f32.mrf.mxu0
    %v747 = vadd.f32 0.0, %v746
    %748 = vdwg.mxu0
    %v749 = vmax.f32 %v687, 0.0
    %v750 = vmax.f32 %v707, 0.0
    %v751 = vmax.f32 %v727, 0.0
    %v752 = vmax.f32 %v747, 0.0
    %753 = vst [vmem:[#allocation9] sm:$0xff] %v749
    %754 = vst [vmem:[#allocation9 + $0x8] sm:$0xff] %v750
    %755 = vst [vmem:[#allocation9 + $0x10] sm:$0xff] %v751
    %756 = vst [vmem:[#allocation9 + $0x18] sm:$0xff] %v752
    // Predicated region
    $region26: #{tpu_custom_call.1} parent=1 // pred_check
      _
    $region27: #{tpu_custom_call.1} parent=1 // pred_check_branch
      %758 = sbr.rel (0) target = $region29
    $region28: #{tpu_custom_call.1} parent=1 // pred_region
      %760 = vsyncadd [#allocation5], 0
      %s762 = sshll.u32 [#allocation9], 4
      %s763 = int_to_ptr.vmem [resolvable:$true] %s762
      %s764 = sshll.u32 %s3, 4
      %s765 = int_to_ptr.hbm [resolvable:$true] %s764
      %767 = dma.vmem_to_hbm [thread:$0]  %s763, 512, %s765, [#allocation5]
    $region29: #{tpu_custom_call.1} parent=1 // pred_fallthru
      _
    // Predicated region
    $region30: #{tpu_custom_call.1} parent=1 // pred_check
      _
    $region31: #{tpu_custom_call.1} parent=1 // pred_check_branch
      %769 = sbr.rel (0) target = $region33
    $region32: #{tpu_custom_call.1} parent=1 // pred_region
      %771 = dma.done [#allocation5], 512
    $region33: #{tpu_custom_call.1} parent=1 // pred_fallthru
      _
    %772 = vsyncpa [#allocation4], 1
    %773 = vsyncpa [#allocation7], 1
    %774 = vsyncpa [#allocation5], 1

</llo_original>
